<compile_context>
chip_gen: v6e
topology: v6e:2x2x1
jax: 0.10.0
libtpu: 0.0.40
codegen_flags: <defaults>
</compile_context>

<pallas_src>
import functools

import jax
import jax.numpy as jnp
from jax import lax
from jax.experimental import pallas as pl
from jax.experimental.pallas import tpu as pltpu


def _round_up(x: int, m: int) -> int:
    return ((x + m - 1) // m) * m


# ----------------------------- Pallas kernel ---------------------------------
def _rnn_time_block_kernel(
    alpha, n_steps,
    # inputs
    drive_ref,   # (Tt, Bp, Np)  precomputed alpha*(X_t @ W_in.T + b) drive, f32
    w_ref,       # (Np, Np)      alpha-scaled fused block weights (resident)
    x0_ref,      # (1, Np)       learnable init hidden state (concat [x0_A|x0_B])
    # outputs
    rates_ref,   # (Tt, Bp, Np)  concatenated rates [r_A | r_B] per step
    # scratch (carried across grid steps)
    x_sc,        # (Bp, Np) f32  hidden state
    r_sc,        # (Bp, Np) f32  previous rates
):
    # region.init_hidden(): broadcast learnable x0 over the batch; rates = tanh(x0)
    @pl.when(pl.program_id(0) == 0)
    def _init():
        x0 = jnp.broadcast_to(x0_ref[...], x_sc.shape)
        x_sc[...] = x0
        r_sc[...] = jnp.tanh(x0)

    w = w_ref[...]                       # resident, already transposed + alpha-scaled
    leak = jnp.float32(1.0 - alpha)

    def step(i, carry):
        # x_t = (1-a)*x_{t-1} + r_{t-1} @ (a*W_full^T) + a*(in_t + b)
        x_new = (
            leak * x_sc[...]
            + jnp.dot(r_sc[...], w, preferred_element_type=jnp.float32)
            + drive_ref[i]
        )
        r_new = jnp.tanh(x_new)
        x_sc[...] = x_new
        r_sc[...] = r_new
        rates_ref[i] = r_new
        return carry

    lax.fori_loop(0, n_steps, step, 0, unroll=True)


# ------------------------------- wrapper --------------------------------------
def multiregion_rnn_forward(X, params, alpha, time_block=None):
    """X: (T, B, D_in) f32. Returns ({'out': (T-1,B,O)}, {'A': (T,B,N_A), 'B': (T,B,N_B)})."""
    T, B, D_in = X.shape
    assert T >= 2, "need at least 2 timesteps (PyTorch loop runs t=1..T-1)"

    W_in, W_rec_a, W_rec_b, W_ab, W_out, b_a, b_b, x0_a, x0_b = (
        params["W_in"], params["W_rec_a"], params["W_rec_b"], params["W_ab"],
        params["W_out"], params["b_a"], params["b_b"], params["x0_a"], params["x0_b"],
    )
    N_A = W_rec_a.shape[0]
    N_B = W_rec_b.shape[0]
    N_tot = N_A + N_B

    # Lane/sublane-dense padded shapes.
    Np = _round_up(max(N_tot, 128), 128)       # last dim -> multiple of 128 lanes
    Bp = _round_up(max(B, 8), 8)               # batch   -> multiple of 8 sublanes

    n_updates = T - 1
    Tt = time_block if time_block is not None else min(n_updates, 16)
    Tt = max(1, Tt)
    Tp = _round_up(n_updates, Tt)
    n_blocks = Tp // Tt

    f32 = jnp.float32
    alpha_f = float(alpha)

    # --- hoisted input projection: one big XLA matmul, alpha and bias folded in.
    # drive[t-1, :, :N_A]       = alpha * (X[t] @ W_in.T + b_a)
    # drive[t-1, :, N_A:N_tot]  = alpha * b_b
    in_a = jnp.einsum("tbd,nd->tbn", X[1:].astype(f32), W_in.astype(f32))
    drive_a = alpha_f * (in_a + b_a.astype(f32))                       # (T-1, B, N_A)
    drive_b = jnp.broadcast_to(alpha_f * b_b.astype(f32), (n_updates, B, N_B))
    drive = jnp.zeros((Tp, Bp, Np), f32)
    drive = drive.at[:n_updates, :B, :N_A].set(drive_a)
    drive = drive.at[:n_updates, :B, N_A:N_tot].set(drive_b)

    # --- fused, pre-transposed, alpha-scaled block weight matrix (padded lanes are 0).
    # r_prev @ W_full gives [alpha * (r_A W_rec_a^T) | alpha * (r_A W_AB^T + r_B W_rec_b^T)]
    # TODO(synk): Connection.effective_W may apply a sparsity/sign mask in the
    # original repo; here the mask is all-ones (dense connection).
    W_full = jnp.zeros((Np, Np), f32)
    W_full = W_full.at[:N_A, :N_A].set(W_rec_a.astype(f32).T)
    W_full = W_full.at[:N_A, N_A:N_tot].set(W_ab.astype(f32).T)
    W_full = W_full.at[N_A:N_tot, N_A:N_tot].set(W_rec_b.astype(f32).T)
    W_full = alpha_f * W_full

    # --- concatenated learnable init state (padded lanes are 0 -> tanh(0)=0, inert).
    x0_full = jnp.zeros((1, Np), f32)
    x0_full = x0_full.at[:, :N_A].set(x0_a.astype(f32))
    x0_full = x0_full.at[:, N_A:N_tot].set(x0_b.astype(f32))

    kernel = functools.partial(_rnn_time_block_kernel, alpha_f, Tt)

    rates_blk = pl.pallas_call(
        kernel,
        out_shape=jax.ShapeDtypeStruct((Tp, Bp, Np), f32),
        grid_spec=pltpu.PrefetchScalarGridSpec(
            num_scalar_prefetch=0,
            grid=(n_blocks,),
            in_specs=[
                pl.BlockSpec((Tt, Bp, Np), lambda tb: (tb, 0, 0)),   # drive (streamed)
                pl.BlockSpec((Np, Np), lambda tb: (0, 0)),           # fused weights (resident)
                pl.BlockSpec((1, Np), lambda tb: (0, 0)),            # x0 (resident)
            ],
            out_specs=pl.BlockSpec((Tt, Bp, Np), lambda tb: (tb, 0, 0)),
            scratch_shapes=[
                pltpu.VMEM((Bp, Np), f32),   # hidden state x
                pltpu.VMEM((Bp, Np), f32),   # previous rates r
            ],
        ),
        compiler_params=pltpu.CompilerParams(
            # time is a sequential carry axis -> must stay "arbitrary"
            dimension_semantics=("arbitrary",),
        ),
    )(drive, W_full, x0_full)

    # --- unpad / split rates, prepend t=0 rates (tanh of init state).
    rates_a_rest = rates_blk[:n_updates, :B, :N_A]
    rates_b_rest = rates_blk[:n_updates, :B, N_A:N_tot]
    r0_a = jnp.broadcast_to(jnp.tanh(x0_a.astype(f32)), (B, N_A))[None]
    r0_b = jnp.broadcast_to(jnp.tanh(x0_b.astype(f32)), (B, N_B))[None]
    rates_a = jnp.concatenate([r0_a, rates_a_rest], axis=0)   # (T, B, N_A)
    rates_b = jnp.concatenate([r0_b, rates_b_rest], axis=0)   # (T, B, N_B)

    # --- hoisted output projection: one XLA matmul over all timesteps.
    out_vals = jnp.einsum("tbn,on->tbo", rates_b[1:], W_out.astype(f32))  # (T-1, B, O)

    # TODO(synk): dynamics_noise is None -> no per-step Gaussian noise is injected.
    return {"out": out_vals}, {"A": rates_a, "B": rates_b}


# --------------------------- pure-JAX reference --------------------------------
def multiregion_rnn_reference(X, params, alpha):
    T, B, _ = X.shape
    W_in, W_rec_a, W_rec_b, W_ab, W_out, b_a, b_b, x0_a, x0_b = (
        params["W_in"], params["W_rec_a"], params["W_rec_b"], params["W_ab"],
        params["W_out"], params["b_a"], params["b_b"], params["x0_a"], params["x0_b"],
    )
    xa = jnp.broadcast_to(x0_a, (B, x0_a.shape[1]))
    xb = jnp.broadcast_to(x0_b, (B, x0_b.shape[1]))
    ra, rb = jnp.tanh(xa), jnp.tanh(xb)
    rates_a, rates_b, outs = [ra], [rb], []
    for t in range(1, T):
        in_a = X[t] @ W_in.T
        in_b = ra @ W_ab.T
        xa = (1 - alpha) * xa + alpha * (ra @ W_rec_a.T + in_a + b_a)
        xb = (1 - alpha) * xb + alpha * (rb @ W_rec_b.T + in_b + b_b)
        ra, rb = jnp.tanh(xa), jnp.tanh(xb)
        rates_a.append(ra)
        rates_b.append(rb)
        outs.append(rb @ W_out.T)
    return ({"out": jnp.stack(outs)},
            {"A": jnp.stack(rates_a), "B": jnp.stack(rates_b)})


# --------------------------------- main ----------------------------------------
if __name__ == "__main__":
    # small shapes consistent with the forward: X is (seq, batch, input_dim)
    T, B, D_in = 8, 4, 8
    N_A, N_B, O = 32, 32, 4
    ALPHA = 0.2

    key = jax.random.PRNGKey(0)
    ks = jax.random.split(key, 10)
    scale = 0.3
    params = {
        "W_in":    scale * jax.random.normal(ks[0], (N_A, D_in), jnp.float32),
        "W_rec_a": scale * jax.random.normal(ks[1], (N_A, N_A), jnp.float32) / jnp.sqrt(N_A),
        "W_rec_b": scale * jax.random.normal(ks[2], (N_B, N_B), jnp.float32) / jnp.sqrt(N_B),
        "W_ab":    scale * jax.random.normal(ks[3], (N_B, N_A), jnp.float32) / jnp.sqrt(N_A),
        "W_out":   scale * jax.random.normal(ks[4], (O, N_B), jnp.float32) / jnp.sqrt(N_B),
        "b_a":     0.1 * jax.random.normal(ks[5], (1, N_A), jnp.float32),
        "b_b":     0.1 * jax.random.normal(ks[6], (1, N_B), jnp.float32),
        "x0_a":    0.1 * jax.random.normal(ks[7], (1, N_A), jnp.float32),
        "x0_b":    0.1 * jax.random.normal(ks[8], (1, N_B), jnp.float32),
    }
    X = jax.random.normal(ks[9], (T, B, D_in), jnp.float32)

    outputs, rates = multiregion_rnn_forward(X, params, ALPHA)
    jax.block_until_ready((outputs, rates))

    ref_outputs, ref_rates = multiregion_rnn_reference(X, params, ALPHA)

    assert outputs["out"].shape == (T - 1, B, O)
    assert rates["A"].shape == (T, B, N_A) and rates["B"].shape == (T, B, N_B)
    assert jnp.allclose(outputs["out"], ref_outputs["out"], atol=2e-5, rtol=2e-5)
    assert jnp.allclose(rates["A"], ref_rates["A"], atol=2e-5, rtol=2e-5)
    assert jnp.allclose(rates["B"], ref_rates["B"], atol=2e-5, rtol=2e-5)

    print("KERNEL_OK")
</pallas_src>

<mosaic_0001>
module attributes {stable_mosaic.version = 11 : i64} {
  func.func @_rnn_time_block_kernel(%arg0: i32, %arg1: memref<7x8x128xf32, #tpu.memory_space<vmem>>, %arg2: memref<128x128xf32, #tpu.memory_space<vmem>>, %arg3: memref<1x128xf32, #tpu.memory_space<vmem>>, %arg4: memref<7x8x128xf32, #tpu.memory_space<vmem>>, %arg5: memref<8x128xf32, #tpu.memory_space<vmem>>, %arg6: memref<8x128xf32, #tpu.memory_space<vmem>>) attributes {dimension_semantics = [#tpu.dimension_semantics<arbitrary>], iteration_bounds = array<i64: 1>, scalar_prefetch = 0 : i64, scratch_operands = 2 : i64, tpu.core_type = #tpu.core_type<tc>, window_params = [{transform_indices = @transform_0, window_bounds = array<i64: 7, 8, 128>}, {pipeline_mode = #tpu.pipeline_mode<synchronous>, transform_indices = @transform_1, window_bounds = array<i64: 128, 128>}, {pipeline_mode = #tpu.pipeline_mode<synchronous>, transform_indices = @transform_2, window_bounds = array<i64: 1, 128>}, {transform_indices = @transform_3, window_bounds = array<i64: 7, 8, 128>}]} {
    %c0_i32 = arith.constant 0 : i32
    %0 = arith.cmpi eq, %arg0, %c0_i32 : i32
    %1 = arith.extui %0 : i1 to i32
    %c0_i32_0 = arith.constant 0 : i32
    %2 = arith.cmpi ne, %1, %c0_i32_0 : i32
    scf.if %2 {
      %c0_94 = arith.constant 0 : index
      %c0_95 = arith.constant 0 : index
      %123 = vector.load %arg3[%c0_94, %c0_95] : memref<1x128xf32, #tpu.memory_space<vmem>>, vector<1x128xf32>
      %124 = vector.shape_cast %123 : vector<1x128xf32> to vector<1x128xf32>
      %125 = vector.broadcast %124 : vector<1x128xf32> to vector<8x128xf32>
      %c0_96 = arith.constant 0 : index
      %c0_97 = arith.constant 0 : index
      %126 = vector.load %arg5[%c0_96, %c0_97] : memref<8x128xf32, #tpu.memory_space<vmem>>, vector<8x128xf32>
      tpu.vector_store %arg5[%c0_96, %c0_97], %125 {strides = array<i32>} : memref<8x128xf32, #tpu.memory_space<vmem>>, vector<8x128xf32>,
      %127 = math.tanh %125 : vector<8x128xf32>
      %c0_98 = arith.constant 0 : index
      %c0_99 = arith.constant 0 : index
      %128 = vector.load %arg6[%c0_98, %c0_99] : memref<8x128xf32, #tpu.memory_space<vmem>>, vector<8x128xf32>
      tpu.vector_store %arg6[%c0_98, %c0_99], %127 {strides = array<i32>} : memref<8x128xf32, #tpu.memory_space<vmem>>, vector<8x128xf32>,
    } else {
    }
    %c0 = arith.constant 0 : index
    %c0_1 = arith.constant 0 : index
    %3 = vector.load %arg2[%c0, %c0_1] : memref<128x128xf32, #tpu.memory_space<vmem>>, vector<128x128xf32>
    %cst = arith.constant 8.000000e-01 : f32
    %c0_i32_2 = arith.constant 0 : i32
    %c0_3 = arith.constant 0 : index
    %c0_4 = arith.constant 0 : index
    %4 = vector.load %arg5[%c0_3, %c0_4] : memref<8x128xf32, #tpu.memory_space<vmem>>, vector<8x128xf32>
    %5 = vector.broadcast %cst : f32 to vector<8x128xf32>
    %6 = arith.mulf %5, %4 : vector<8x128xf32>
    %c0_5 = arith.constant 0 : index
    %c0_6 = arith.constant 0 : index
    %7 = vector.load %arg6[%c0_5, %c0_6] : memref<8x128xf32, #tpu.memory_space<vmem>>, vector<8x128xf32>
    %cst_7 = arith.constant dense<0.000000e+00> : vector<8x128xf32>
    %8 = tpu.matmul %7, %3, %cst_7 {dimension_numbers = #tpu.dot_dimension_numbers<[1], [0], [0], [1], [0, 0, 1, 1], [], []>} : vector<8x128xf32>, vector<128x128xf32>, vector<8x128xf32> -> vector<8x128xf32>
    %9 = arith.addf %6, %8 : vector<8x128xf32>
    %10 = arith.index_cast %c0_i32_2 : i32 to index
    %c0_8 = arith.constant 0 : index
    %c0_9 = arith.constant 0 : index
    %11 = vector.load %arg1[%10, %c0_8, %c0_9] : memref<7x8x128xf32, #tpu.memory_space<vmem>>, vector<1x8x128xf32>
    %12 = vector.shape_cast %11 : vector<1x8x128xf32> to vector<8x128xf32>
    %13 = arith.addf %9, %12 : vector<8x128xf32>
    %14 = math.tanh %13 : vector<8x128xf32>
    %c0_10 = arith.constant 0 : index
    %c0_11 = arith.constant 0 : index
    %15 = vector.load %arg5[%c0_10, %c0_11] : memref<8x128xf32, #tpu.memory_space<vmem>>, vector<8x128xf32>
    tpu.vector_store %arg5[%c0_10, %c0_11], %13 {strides = array<i32>} : memref<8x128xf32, #tpu.memory_space<vmem>>, vector<8x128xf32>,
    %c0_12 = arith.constant 0 : index
    %c0_13 = arith.constant 0 : index
    %16 = vector.load %arg6[%c0_12, %c0_13] : memref<8x128xf32, #tpu.memory_space<vmem>>, vector<8x128xf32>
    tpu.vector_store %arg6[%c0_12, %c0_13], %14 {strides = array<i32>} : memref<8x128xf32, #tpu.memory_space<vmem>>, vector<8x128xf32>,
    %17 = arith.index_cast %c0_i32_2 : i32 to index
    %c0_14 = arith.constant 0 : index
    %c0_15 = arith.constant 0 : index
    %18 = vector.load %arg4[%17, %c0_14, %c0_15] : memref<7x8x128xf32, #tpu.memory_space<vmem>>, vector<1x8x128xf32>
    %19 = vector.shape_cast %18 : vector<1x8x128xf32> to vector<8x128xf32>
    %20 = vector.shape_cast %14 : vector<8x128xf32> to vector<1x8x128xf32>
    tpu.vector_store %arg4[%17, %c0_14, %c0_15], %20 {strides = array<i32>} : memref<7x8x128xf32, #tpu.memory_space<vmem>>, vector<1x8x128xf32>,
    %c1_i32 = arith.constant 1 : i32
    %c0_16 = arith.constant 0 : index
    %c0_17 = arith.constant 0 : index
    %21 = vector.load %arg5[%c0_16, %c0_17] : memref<8x128xf32, #tpu.memory_space<vmem>>, vector<8x128xf32>
    %22 = vector.broadcast %cst : f32 to vector<8x128xf32>
    %23 = arith.mulf %22, %21 : vector<8x128xf32>
    %c0_18 = arith.constant 0 : index
    %c0_19 = arith.constant 0 : index
    %24 = vector.load %arg6[%c0_18, %c0_19] : memref<8x128xf32, #tpu.memory_space<vmem>>, vector<8x128xf32>
    %cst_20 = arith.constant dense<0.000000e+00> : vector<8x128xf32>
    %25 = tpu.matmul %24, %3, %cst_20 {dimension_numbers = #tpu.dot_dimension_numbers<[1], [0], [0], [1], [0, 0, 1, 1], [], []>} : vector<8x128xf32>, vector<128x128xf32>, vector<8x128xf32> -> vector<8x128xf32>
    %26 = arith.addf %23, %25 : vector<8x128xf32>
    %27 = arith.index_cast %c1_i32 : i32 to index
    %c0_21 = arith.constant 0 : index
    %c0_22 = arith.constant 0 : index
    %28 = vector.load %arg1[%27, %c0_21, %c0_22] : memref<7x8x128xf32, #tpu.memory_space<vmem>>, vector<1x8x128xf32>
    %29 = vector.shape_cast %28 : vector<1x8x128xf32> to vector<8x128xf32>
    %30 = arith.addf %26, %29 : vector<8x128xf32>
    %31 = math.tanh %30 : vector<8x128xf32>
    %c0_23 = arith.constant 0 : index
    %c0_24 = arith.constant 0 : index
    %32 = vector.load %arg5[%c0_23, %c0_24] : memref<8x128xf32, #tpu.memory_space<vmem>>, vector<8x128xf32>
    tpu.vector_store %arg5[%c0_23, %c0_24], %30 {strides = array<i32>} : memref<8x128xf32, #tpu.memory_space<vmem>>, vector<8x128xf32>,
    %c0_25 = arith.constant 0 : index
    %c0_26 = arith.constant 0 : index
    %33 = vector.load %arg6[%c0_25, %c0_26] : memref<8x128xf32, #tpu.memory_space<vmem>>, vector<8x128xf32>
    tpu.vector_store %arg6[%c0_25, %c0_26], %31 {strides = array<i32>} : memref<8x128xf32, #tpu.memory_space<vmem>>, vector<8x128xf32>,
    %34 = arith.index_cast %c1_i32 : i32 to index
    %c0_27 = arith.constant 0 : index
    %c0_28 = arith.constant 0 : index
    %35 = vector.load %arg4[%34, %c0_27, %c0_28] : memref<7x8x128xf32, #tpu.memory_space<vmem>>, vector<1x8x128xf32>
    %36 = vector.shape_cast %35 : vector<1x8x128xf32> to vector<8x128xf32>
    %37 = vector.shape_cast %31 : vector<8x128xf32> to vector<1x8x128xf32>
    tpu.vector_store %arg4[%34, %c0_27, %c0_28], %37 {strides = array<i32>} : memref<7x8x128xf32, #tpu.memory_space<vmem>>, vector<1x8x128xf32>,
    %c2_i32 = arith.constant 2 : i32
    %c0_29 = arith.constant 0 : index
    %c0_30 = arith.constant 0 : index
    %38 = vector.load %arg5[%c0_29, %c0_30] : memref<8x128xf32, #tpu.memory_space<vmem>>, vector<8x128xf32>
    %39 = vector.broadcast %cst : f32 to vector<8x128xf32>
    %40 = arith.mulf %39, %38 : vector<8x128xf32>
    %c0_31 = arith.constant 0 : index
    %c0_32 = arith.constant 0 : index
    %41 = vector.load %arg6[%c0_31, %c0_32] : memref<8x128xf32, #tpu.memory_space<vmem>>, vector<8x128xf32>
    %cst_33 = arith.constant dense<0.000000e+00> : vector<8x128xf32>
    %42 = tpu.matmul %41, %3, %cst_33 {dimension_numbers = #tpu.dot_dimension_numbers<[1], [0], [0], [1], [0, 0, 1, 1], [], []>} : vector<8x128xf32>, vector<128x128xf32>, vector<8x128xf32> -> vector<8x128xf32>
    %43 = arith.addf %40, %42 : vector<8x128xf32>
    %44 = arith.index_cast %c2_i32 : i32 to index
    %c0_34 = arith.constant 0 : index
    %c0_35 = arith.constant 0 : index
    %45 = vector.load %arg1[%44, %c0_34, %c0_35] : memref<7x8x128xf32, #tpu.memory_space<vmem>>, vector<1x8x128xf32>
    %46 = vector.shape_cast %45 : vector<1x8x128xf32> to vector<8x128xf32>
    %47 = arith.addf %43, %46 : vector<8x128xf32>
    %48 = math.tanh %47 : vector<8x128xf32>
    %c0_36 = arith.constant 0 : index
    %c0_37 = arith.constant 0 : index
    %49 = vector.load %arg5[%c0_36, %c0_37] : memref<8x128xf32, #tpu.memory_space<vmem>>, vector<8x128xf32>
    tpu.vector_store %arg5[%c0_36, %c0_37], %47 {strides = array<i32>} : memref<8x128xf32, #tpu.memory_space<vmem>>, vector<8x128xf32>,
    %c0_38 = arith.constant 0 : index
    %c0_39 = arith.constant 0 : index
    %50 = vector.load %arg6[%c0_38, %c0_39] : memref<8x128xf32, #tpu.memory_space<vmem>>, vector<8x128xf32>
    tpu.vector_store %arg6[%c0_38, %c0_39], %48 {strides = array<i32>} : memref<8x128xf32, #tpu.memory_space<vmem>>, vector<8x128xf32>,
    %51 = arith.index_cast %c2_i32 : i32 to index
    %c0_40 = arith.constant 0 : index
    %c0_41 = arith.constant 0 : index
    %52 = vector.load %arg4[%51, %c0_40, %c0_41] : memref<7x8x128xf32, #tpu.memory_space<vmem>>, vector<1x8x128xf32>
    %53 = vector.shape_cast %52 : vector<1x8x128xf32> to vector<8x128xf32>
    %54 = vector.shape_cast %48 : vector<8x128xf32> to vector<1x8x128xf32>
    tpu.vector_store %arg4[%51, %c0_40, %c0_41], %54 {strides = array<i32>} : memref<7x8x128xf32, #tpu.memory_space<vmem>>, vector<1x8x128xf32>,
    %c3_i32 = arith.constant 3 : i32
    %c0_42 = arith.constant 0 : index
    %c0_43 = arith.constant 0 : index
    %55 = vector.load %arg5[%c0_42, %c0_43] : memref<8x128xf32, #tpu.memory_space<vmem>>, vector<8x128xf32>
    %56 = vector.broadcast %cst : f32 to vector<8x128xf32>
    %57 = arith.mulf %56, %55 : vector<8x128xf32>
    %c0_44 = arith.constant 0 : index
    %c0_45 = arith.constant 0 : index
    %58 = vector.load %arg6[%c0_44, %c0_45] : memref<8x128xf32, #tpu.memory_space<vmem>>, vector<8x128xf32>
    %cst_46 = arith.constant dense<0.000000e+00> : vector<8x128xf32>
    %59 = tpu.matmul %58, %3, %cst_46 {dimension_numbers = #tpu.dot_dimension_numbers<[1], [0], [0], [1], [0, 0, 1, 1], [], []>} : vector<8x128xf32>, vector<128x128xf32>, vector<8x128xf32> -> vector<8x128xf32>
    %60 = arith.addf %57, %59 : vector<8x128xf32>
    %61 = arith.index_cast %c3_i32 : i32 to index
    %c0_47 = arith.constant 0 : index
    %c0_48 = arith.constant 0 : index
    %62 = vector.load %arg1[%61, %c0_47, %c0_48] : memref<7x8x128xf32, #tpu.memory_space<vmem>>, vector<1x8x128xf32>
    %63 = vector.shape_cast %62 : vector<1x8x128xf32> to vector<8x128xf32>
    %64 = arith.addf %60, %63 : vector<8x128xf32>
    %65 = math.tanh %64 : vector<8x128xf32>
    %c0_49 = arith.constant 0 : index
    %c0_50 = arith.constant 0 : index
    %66 = vector.load %arg5[%c0_49, %c0_50] : memref<8x128xf32, #tpu.memory_space<vmem>>, vector<8x128xf32>
    tpu.vector_store %arg5[%c0_49, %c0_50], %64 {strides = array<i32>} : memref<8x128xf32, #tpu.memory_space<vmem>>, vector<8x128xf32>,
    %c0_51 = arith.constant 0 : index
    %c0_52 = arith.constant 0 : index
    %67 = vector.load %arg6[%c0_51, %c0_52] : memref<8x128xf32, #tpu.memory_space<vmem>>, vector<8x128xf32>
    tpu.vector_store %arg6[%c0_51, %c0_52], %65 {strides = array<i32>} : memref<8x128xf32, #tpu.memory_space<vmem>>, vector<8x128xf32>,
    %68 = arith.index_cast %c3_i32 : i32 to index
    %c0_53 = arith.constant 0 : index
    %c0_54 = arith.constant 0 : index
    %69 = vector.load %arg4[%68, %c0_53, %c0_54] : memref<7x8x128xf32, #tpu.memory_space<vmem>>, vector<1x8x128xf32>
    %70 = vector.shape_cast %69 : vector<1x8x128xf32> to vector<8x128xf32>
    %71 = vector.shape_cast %65 : vector<8x128xf32> to vector<1x8x128xf32>
    tpu.vector_store %arg4[%68, %c0_53, %c0_54], %71 {strides = array<i32>} : memref<7x8x128xf32, #tpu.memory_space<vmem>>, vector<1x8x128xf32>,
    %c4_i32 = arith.constant 4 : i32
    %c0_55 = arith.constant 0 : index
    %c0_56 = arith.constant 0 : index
    %72 = vector.load %arg5[%c0_55, %c0_56] : memref<8x128xf32, #tpu.memory_space<vmem>>, vector<8x128xf32>
    %73 = vector.broadcast %cst : f32 to vector<8x128xf32>
    %74 = arith.mulf %73, %72 : vector<8x128xf32>
    %c0_57 = arith.constant 0 : index
    %c0_58 = arith.constant 0 : index
    %75 = vector.load %arg6[%c0_57, %c0_58] : memref<8x128xf32, #tpu.memory_space<vmem>>, vector<8x128xf32>
    %cst_59 = arith.constant dense<0.000000e+00> : vector<8x128xf32>
    %76 = tpu.matmul %75, %3, %cst_59 {dimension_numbers = #tpu.dot_dimension_numbers<[1], [0], [0], [1], [0, 0, 1, 1], [], []>} : vector<8x128xf32>, vector<128x128xf32>, vector<8x128xf32> -> vector<8x128xf32>
    %77 = arith.addf %74, %76 : vector<8x128xf32>
    %78 = arith.index_cast %c4_i32 : i32 to index
    %c0_60 = arith.constant 0 : index
    %c0_61 = arith.constant 0 : index
    %79 = vector.load %arg1[%78, %c0_60, %c0_61] : memref<7x8x128xf32, #tpu.memory_space<vmem>>, vector<1x8x128xf32>
    %80 = vector.shape_cast %79 : vector<1x8x128xf32> to vector<8x128xf32>
    %81 = arith.addf %77, %80 : vector<8x128xf32>
    %82 = math.tanh %81 : vector<8x128xf32>
    %c0_62 = arith.constant 0 : index
    %c0_63 = arith.constant 0 : index
    %83 = vector.load %arg5[%c0_62, %c0_63] : memref<8x128xf32, #tpu.memory_space<vmem>>, vector<8x128xf32>
    tpu.vector_store %arg5[%c0_62, %c0_63], %81 {strides = array<i32>} : memref<8x128xf32, #tpu.memory_space<vmem>>, vector<8x128xf32>,
    %c0_64 = arith.constant 0 : index
    %c0_65 = arith.constant 0 : index
    %84 = vector.load %arg6[%c0_64, %c0_65] : memref<8x128xf32, #tpu.memory_space<vmem>>, vector<8x128xf32>
    tpu.vector_store %arg6[%c0_64, %c0_65], %82 {strides = array<i32>} : memref<8x128xf32, #tpu.memory_space<vmem>>, vector<8x128xf32>,
    %85 = arith.index_cast %c4_i32 : i32 to index
    %c0_66 = arith.constant 0 : index
    %c0_67 = arith.constant 0 : index
    %86 = vector.load %arg4[%85, %c0_66, %c0_67] : memref<7x8x128xf32, #tpu.memory_space<vmem>>, vector<1x8x128xf32>
    %87 = vector.shape_cast %86 : vector<1x8x128xf32> to vector<8x128xf32>
    %88 = vector.shape_cast %82 : vector<8x128xf32> to vector<1x8x128xf32>
    tpu.vector_store %arg4[%85, %c0_66, %c0_67], %88 {strides = array<i32>} : memref<7x8x128xf32, #tpu.memory_space<vmem>>, vector<1x8x128xf32>,
    %c5_i32 = arith.constant 5 : i32
    %c0_68 = arith.constant 0 : index
    %c0_69 = arith.constant 0 : index
    %89 = vector.load %arg5[%c0_68, %c0_69] : memref<8x128xf32, #tpu.memory_space<vmem>>, vector<8x128xf32>
    %90 = vector.broadcast %cst : f32 to vector<8x128xf32>
    %91 = arith.mulf %90, %89 : vector<8x128xf32>
    %c0_70 = arith.constant 0 : index
    %c0_71 = arith.constant 0 : index
    %92 = vector.load %arg6[%c0_70, %c0_71] : memref<8x128xf32, #tpu.memory_space<vmem>>, vector<8x128xf32>
    %cst_72 = arith.constant dense<0.000000e+00> : vector<8x128xf32>
    %93 = tpu.matmul %92, %3, %cst_72 {dimension_numbers = #tpu.dot_dimension_numbers<[1], [0], [0], [1], [0, 0, 1, 1], [], []>} : vector<8x128xf32>, vector<128x128xf32>, vector<8x128xf32> -> vector<8x128xf32>
    %94 = arith.addf %91, %93 : vector<8x128xf32>
    %95 = arith.index_cast %c5_i32 : i32 to index
    %c0_73 = arith.constant 0 : index
    %c0_74 = arith.constant 0 : index
    %96 = vector.load %arg1[%95, %c0_73, %c0_74] : memref<7x8x128xf32, #tpu.memory_space<vmem>>, vector<1x8x128xf32>
    %97 = vector.shape_cast %96 : vector<1x8x128xf32> to vector<8x128xf32>
    %98 = arith.addf %94, %97 : vector<8x128xf32>
    %99 = math.tanh %98 : vector<8x128xf32>
    %c0_75 = arith.constant 0 : index
    %c0_76 = arith.constant 0 : index
    %100 = vector.load %arg5[%c0_75, %c0_76] : memref<8x128xf32, #tpu.memory_space<vmem>>, vector<8x128xf32>
    tpu.vector_store %arg5[%c0_75, %c0_76], %98 {strides = array<i32>} : memref<8x128xf32, #tpu.memory_space<vmem>>, vector<8x128xf32>,
    %c0_77 = arith.constant 0 : index
    %c0_78 = arith.constant 0 : index
    %101 = vector.load %arg6[%c0_77, %c0_78] : memref<8x128xf32, #tpu.memory_space<vmem>>, vector<8x128xf32>
    tpu.vector_store %arg6[%c0_77, %c0_78], %99 {strides = array<i32>} : memref<8x128xf32, #tpu.memory_space<vmem>>, vector<8x128xf32>,
    %102 = arith.index_cast %c5_i32 : i32 to index
    %c0_79 = arith.constant 0 : index
    %c0_80 = arith.constant 0 : index
    %103 = vector.load %arg4[%102, %c0_79, %c0_80] : memref<7x8x128xf32, #tpu.memory_space<vmem>>, vector<1x8x128xf32>
    %104 = vector.shape_cast %103 : vector<1x8x128xf32> to vector<8x128xf32>
    %105 = vector.shape_cast %99 : vector<8x128xf32> to vector<1x8x128xf32>
    tpu.vector_store %arg4[%102, %c0_79, %c0_80], %105 {strides = array<i32>} : memref<7x8x128xf32, #tpu.memory_space<vmem>>, vector<1x8x128xf32>,
    %c6_i32 = arith.constant 6 : i32
    %c0_81 = arith.constant 0 : index
    %c0_82 = arith.constant 0 : index
    %106 = vector.load %arg5[%c0_81, %c0_82] : memref<8x128xf32, #tpu.memory_space<vmem>>, vector<8x128xf32>
    %107 = vector.broadcast %cst : f32 to vector<8x128xf32>
    %108 = arith.mulf %107, %106 : vector<8x128xf32>
    %c0_83 = arith.constant 0 : index
    %c0_84 = arith.constant 0 : index
    %109 = vector.load %arg6[%c0_83, %c0_84] : memref<8x128xf32, #tpu.memory_space<vmem>>, vector<8x128xf32>
    %cst_85 = arith.constant dense<0.000000e+00> : vector<8x128xf32>
    %110 = tpu.matmul %109, %3, %cst_85 {dimension_numbers = #tpu.dot_dimension_numbers<[1], [0], [0], [1], [0, 0, 1, 1], [], []>} : vector<8x128xf32>, vector<128x128xf32>, vector<8x128xf32> -> vector<8x128xf32>
    %111 = arith.addf %108, %110 : vector<8x128xf32>
    %112 = arith.index_cast %c6_i32 : i32 to index
    %c0_86 = arith.constant 0 : index
    %c0_87 = arith.constant 0 : index
    %113 = vector.load %arg1[%112, %c0_86, %c0_87] : memref<7x8x128xf32, #tpu.memory_space<vmem>>, vector<1x8x128xf32>
    %114 = vector.shape_cast %113 : vector<1x8x128xf32> to vector<8x128xf32>
    %115 = arith.addf %111, %114 : vector<8x128xf32>
    %116 = math.tanh %115 : vector<8x128xf32>
    %c0_88 = arith.constant 0 : index
    %c0_89 = arith.constant 0 : index
    %117 = vector.load %arg5[%c0_88, %c0_89] : memref<8x128xf32, #tpu.memory_space<vmem>>, vector<8x128xf32>
    tpu.vector_store %arg5[%c0_88, %c0_89], %115 {strides = array<i32>} : memref<8x128xf32, #tpu.memory_space<vmem>>, vector<8x128xf32>,
    %c0_90 = arith.constant 0 : index
    %c0_91 = arith.constant 0 : index
    %118 = vector.load %arg6[%c0_90, %c0_91] : memref<8x128xf32, #tpu.memory_space<vmem>>, vector<8x128xf32>
    tpu.vector_store %arg6[%c0_90, %c0_91], %116 {strides = array<i32>} : memref<8x128xf32, #tpu.memory_space<vmem>>, vector<8x128xf32>,
    %119 = arith.index_cast %c6_i32 : i32 to index
    %c0_92 = arith.constant 0 : index
    %c0_93 = arith.constant 0 : index
    %120 = vector.load %arg4[%119, %c0_92, %c0_93] : memref<7x8x128xf32, #tpu.memory_space<vmem>>, vector<1x8x128xf32>
    %121 = vector.shape_cast %120 : vector<1x8x128xf32> to vector<8x128xf32>
    %122 = vector.shape_cast %116 : vector<8x128xf32> to vector<1x8x128xf32>
    tpu.vector_store %arg4[%119, %c0_92, %c0_93], %122 {strides = array<i32>} : memref<7x8x128xf32, #tpu.memory_space<vmem>>, vector<1x8x128xf32>,
    %c7_i32 = arith.constant 7 : i32
    return
  }
  func.func @transform_0(%arg0: i32) -> (i32, i32, i32) {
    %c0_i32 = arith.constant 0 : i32
    %c0_i32_0 = arith.constant 0 : i32
    %c0_i32_1 = arith.constant 0 : i32
    return %arg0, %c0_i32, %c0_i32_0 : i32, i32, i32
  }
  func.func @transform_1(%arg0: i32) -> (i32, i32) {
    %c0_i32 = arith.constant 0 : i32
    %c0_i32_0 = arith.constant 0 : i32
    %c0_i32_1 = arith.constant 0 : i32
    return %c0_i32, %c0_i32_0 : i32, i32
  }
  func.func @transform_2(%arg0: i32) -> (i32, i32) {
    %c0_i32 = arith.constant 0 : i32
    %c0_i32_0 = arith.constant 0 : i32
    %c0_i32_1 = arith.constant 0 : i32
    return %c0_i32, %c0_i32_0 : i32, i32
  }
  func.func @transform_3(%arg0: i32) -> (i32, i32, i32) {
    %c0_i32 = arith.constant 0 : i32
    %c0_i32_0 = arith.constant 0 : i32
    %c0_i32_1 = arith.constant 0 : i32
    return %arg0, %c0_i32, %c0_i32_0 : i32, i32, i32
  }
}

</mosaic_0001>

<llo_original>
// kernel: tpu_custom_call.1
$region0: #{tpu_custom_call.1}
  #allocation0 [shape = 'u32[]', space=smem, size = 0x4, offset = 0x4, fixed_abs, tag = 'smem constant byte address 0x4 - core index']
  #allocation1 [shape = 'u32[144,128]{1,0:T(1,128)}', space=vmem, size = 0x12000, scoped, tag = 'internal scratch']
  #allocation2 [shape = 'f32[8,128]{1,0:T(8,128)}', space=vmem, size = 0x1000, scoped, tag = 'scratch operand']
  #allocation3 [shape = 'f32[8,128]{1,0:T(8,128)}', space=vmem, size = 0x1000, scoped, tag = 'scratch operand']
  %s0 = inlined_call_operand.hbm [shape: f32[7,8,128], index: 0, kind: input, shape index: {}]
  %s1 = inlined_call_operand.hbm [shape: f32[128,128], index: 1, kind: input, shape index: {}]
  %s2 = inlined_call_operand.vmem [shape: f32[1,128], index: 2, kind: input, shape index: {}]
  %s3 = inlined_call_operand.hbm [shape: f32[7,8,128], index: 3, kind: output, shape index: {}]
  %s4 = sld [smem:[#allocation0]]
  $region34: #{tpu_custom_call.1} parent=0
    _
  %s6 = ssub.s32 1, %s4
  %s7 = scalar_select 0, %s6, %s4
  $region1: #{tpu_custom_call.1} parent=0
    #allocation4 [shape = 'u8[28672]{0}', space=vmem, size = 0x7000, scoped, tag = 'input window, operand 0, single buffered']
    #allocation5 [shape = 's32[1]{0}', space=sflag, size = 0x4, scoped, tag = 'scoped memory for tpu_custom_call.1']
    #allocation6 [shape = 's32[1]{0}', space=sflag, size = 0x4, scoped, tag = 'scoped memory for tpu_custom_call.1']
    #allocation7 [shape = 'u8[65536]{0}', space=vmem, size = 0x10000, scoped, tag = 'input window, operand 1, single buffered']
    #allocation8 [shape = 's32[1]{0}', space=sflag, size = 0x4, scoped, tag = 'scoped memory for tpu_custom_call.1']
    #allocation9 [shape = 'u8[28672]{0}', space=vmem, size = 0x7000, scoped, tag = 'output window, operand 0, single buffered']
    %8 = vsyncpa [#allocation5], 0
    %9 = vsyncpa [#allocation8], 0
    %10 = vsyncpa [#allocation6], 0
    // Predicated region
    $region2: #{tpu_custom_call.1} parent=1 // pred_check
      _
    $region3: #{tpu_custom_call.1} parent=1 // pred_check_branch
      %12 = sbr.rel (0) target = $region5
    $region4: #{tpu_custom_call.1} parent=1 // pred_region
      %s14 = ssub.s32 896, 896
      %15 = vsyncadd [#allocation5], %s14
      %s16 = sshll.u32 [#allocation4], 4
      %s17 = int_to_ptr.vmem [resolvable:$true] %s16
      %22 = dma.hbm_to_vmem [thread:$0]  %s0, 896, %s17, [#allocation5], 128, 128, 8
    $region5: #{tpu_custom_call.1} parent=1 // pred_fallthru
      _
    // Predicated region
    $region6: #{tpu_custom_call.1} parent=1 // pred_check
      _
    $region7: #{tpu_custom_call.1} parent=1 // pred_check_branch
      %24 = sbr.rel (0) target = $region9
    $region8: #{tpu_custom_call.1} parent=1 // pred_region
      %s26 = ssub.s32 2048, 2048
      %27 = vsyncadd [#allocation8], %s26
      %s28 = sshll.u32 [#allocation7], 4
      %s29 = int_to_ptr.vmem [resolvable:$true] %s28
      %34 = dma.hbm_to_vmem [thread:$0]  %s1, 2048, %s29, [#allocation8], 128, 128, 8
    $region9: #{tpu_custom_call.1} parent=1 // pred_fallthru
      _
    // Predicated region
    $region10: #{tpu_custom_call.1} parent=1 // pred_check
      _
    $region11: #{tpu_custom_call.1} parent=1 // pred_check_branch
      %36 = sbr.rel (0) target = $region13
    $region12: #{tpu_custom_call.1} parent=1 // pred_region
      _
    $region13: #{tpu_custom_call.1} parent=1 // pred_fallthru
      _
    // Predicated region
    $region14: #{tpu_custom_call.1} parent=1 // pred_check
      _
    $region15: #{tpu_custom_call.1} parent=1 // pred_check_branch
      %38 = sbr.rel (0) target = $region17
    $region16: #{tpu_custom_call.1} parent=1 // pred_region
      %39 = dma.done [#allocation5], 896
    $region17: #{tpu_custom_call.1} parent=1 // pred_fallthru
      _
    // Predicated region
    $region18: #{tpu_custom_call.1} parent=1 // pred_check
      _
    $region19: #{tpu_custom_call.1} parent=1 // pred_check_branch
      %41 = sbr.rel (0) target = $region21
    $region20: #{tpu_custom_call.1} parent=1 // pred_region
      %42 = dma.done [#allocation8], 2048
    $region21: #{tpu_custom_call.1} parent=1 // pred_fallthru
      _
    %p43 = scmp.eq.s32.totalorder 0, 0
    // Predicated region
    $region22: #{tpu_custom_call.1} parent=1 // pred_check
      %p44 = pneg %p43
    $region23: #{tpu_custom_call.1} parent=1 // pred_check_branch
      %46 = sbr.rel (%p44) target = $region25
    $region24: #{tpu_custom_call.1} parent=1 // pred_region
      %v47 = vld [vmem:[%s2] sm:$0x1]
      %v49 = vlaneseq
      %v50 = vshrl.u32 %v49, 7
      %v51 = vsub.s32 0, %v50
      %v52 = vrot.slane %v47, %v51
      %54 = vst [vmem:[#allocation2] sm:$0xff] %v52
      %v55 = vtanh.pop %v52
      %56 = vst [vmem:[#allocation3] sm:$0xff] %v55
    $region25: #{tpu_custom_call.1} parent=1 // pred_fallthru
      _
    %v57 = vld [vmem:[#allocation7] sm:$0xff]
    %v58 = vld [vmem:[#allocation7 + $0x8] sm:$0xff]
    %v59 = vld [vmem:[#allocation7 + $0x10] sm:$0xff]
    %v60 = vld [vmem:[#allocation7 + $0x18] sm:$0xff]
    %v61 = vld [vmem:[#allocation7 + $0x20] sm:$0xff]
    %v62 = vld [vmem:[#allocation7 + $0x28] sm:$0xff]
    %v63 = vld [vmem:[#allocation7 + $0x30] sm:$0xff]
    %v64 = vld [vmem:[#allocation7 + $0x38] sm:$0xff]
    %v65 = vld [vmem:[#allocation7 + $0x40] sm:$0xff]
    %v66 = vld [vmem:[#allocation7 + $0x48] sm:$0xff]
    %v67 = vld [vmem:[#allocation7 + $0x50] sm:$0xff]
    %v68 = vld [vmem:[#allocation7 + $0x58] sm:$0xff]
    %v69 = vld [vmem:[#allocation7 + $0x60] sm:$0xff]
    %v70 = vld [vmem:[#allocation7 + $0x68] sm:$0xff]
    %v71 = vld [vmem:[#allocation7 + $0x70] sm:$0xff]
    %v72 = vld [vmem:[#allocation7 + $0x78] sm:$0xff]
    %v73 = vld [vmem:[#allocation2] sm:$0xff]
    %v74 = vmul.f32 %v73, 0.8
    %v75 = vld [vmem:[#allocation3] sm:$0xff]
    %76 = vmatprep.subr.mxu0 0.0
    %77 = vmatpush1.msra.mxu0 %v72
    %78 = vmatprep.subr.mxu0 0.0
    %79 = vmatpush1.msra.mxu0 %v71
    %80 = vmatprep.subr.mxu0 0.0
    %81 = vmatpush1.msra.mxu0 %v70
    %82 = vmatprep.subr.mxu0 0.0
    %83 = vmatpush1.msra.mxu0 %v69
    %84 = vmatprep.subr.mxu0 0.0
    %85 = vmatpush1.msra.mxu0 %v68
    %86 = vmatprep.subr.mxu0 0.0
    %87 = vmatpush1.msra.mxu0 %v67
    %88 = vmatprep.subr.mxu0 0.0
    %89 = vmatpush1.msra.mxu0 %v66
    %90 = vmatprep.subr.mxu0 0.0
    %91 = vmatpush1.msra.mxu0 %v65
    %92 = vmatprep.subr.mxu0 0.0
    %93 = vmatpush1.msra.mxu0 %v64
    %94 = vmatprep.subr.mxu0 0.0
    %95 = vmatpush1.msra.mxu0 %v63
    %96 = vmatprep.subr.mxu0 0.0
    %97 = vmatpush1.msra.mxu0 %v62
    %98 = vmatprep.subr.mxu0 0.0
    %99 = vmatpush1.msra.mxu0 %v61
    %100 = vmatprep.subr.mxu0 0.0
    %101 = vmatpush1.msra.mxu0 %v60
    %102 = vmatprep.subr.mxu0 0.0
    %103 = vmatpush1.msra.mxu0 %v59
    %104 = vmatprep.subr.mxu0 0.0
    %105 = vmatpush1.msra.mxu0 %v58
    %106 = vmatprep.subr.mxu0 0.0
    %107 = vmatpush1.msra.mxu0 %v57
    %108 = vmatprep.subr.mxu0 0.0
    %109 = vmatpush2.msra.mxu0 0.0
    %110 = vmatprep.subr.mxu0 0.0
    %111 = vmatpush2.msra.mxu0 0.0
    %112 = vmatprep.subr.mxu0 0.0
    %113 = vmatpush2.msra.mxu0 0.0
    %114 = vmatprep.subr.mxu0 0.0
    %115 = vmatpush2.msra.mxu0 0.0
    %116 = vmatprep.subr.mxu0 0.0
    %117 = vmatpush2.msra.mxu0 0.0
    %118 = vmatprep.subr.mxu0 0.0
    %119 = vmatpush2.msra.mxu0 0.0
    %120 = vmatprep.subr.mxu0 0.0
    %121 = vmatpush2.msra.mxu0 0.0
    %122 = vmatprep.subr.mxu0 0.0
    %123 = vmatpush2.msra.mxu0 0.0
    %124 = vmatprep.subr.mxu0 0.0
    %125 = vmatpush2.msra.mxu0 0.0
    %126 = vmatprep.subr.mxu0 0.0
    %127 = vmatpush2.msra.mxu0 0.0
    %128 = vmatprep.subr.mxu0 0.0
    %129 = vmatpush2.msra.mxu0 0.0
    %130 = vmatprep.subr.mxu0 0.0
    %131 = vmatpush2.msra.mxu0 0.0
    %132 = vmatprep.subr.mxu0 0.0
    %133 = vmatpush2.msra.mxu0 0.0
    %134 = vmatprep.subr.mxu0 0.0
    %135 = vmatpush2.msra.mxu0 0.0
    %136 = vmatprep.subr.mxu0 0.0
    %137 = vmatpush2.msra.mxu0 0.0
    %138 = vmatprep.subr.mxu0 0.0
    %139 = vmatpush2.msra.mxu0 0.0
    %140 = vmatprep.mubr.f32.mxu0 0.0
    %141 = vmatmul.mubr.f32.gmra.mxu0 %v75
    %v142 = vpop.f32.mrf.mxu0
    %v143 = vadd.f32 0.0, %v142
    %v144 = vpop.f32.mrf.mxu0
    %145 = vdwg.mxu0
    %v146 = vadd.f32 %v74, %v143
    %v147 = vld [vmem:[#allocation4] sm:$0xff]
    %v148 = vadd.f32 %v146, %v147
    %v149 = vtanh.pop %v148
    %150 = vst [vmem:[#allocation2] sm:$0xff] %v148
    %151 = vst [vmem:[#allocation3] sm:$0xff] %v149
    %152 = vst [vmem:[#allocation9] sm:$0xff] %v149
    %v153 = vld [vmem:[#allocation2] sm:$0xff]
    %v154 = vmul.f32 %v153, 0.8
    %v155 = vld [vmem:[#allocation3] sm:$0xff]
    %156 = vmatprep.subr.mxu0 0.0
    %157 = vmatpush1.msra.mxu0 %v72
    %158 = vmatprep.subr.mxu0 0.0
    %159 = vmatpush1.msra.mxu0 %v71
    %160 = vmatprep.subr.mxu0 0.0
    %161 = vmatpush1.msra.mxu0 %v70
    %162 = vmatprep.subr.mxu0 0.0
    %163 = vmatpush1.msra.mxu0 %v69
    %164 = vmatprep.subr.mxu0 0.0
    %165 = vmatpush1.msra.mxu0 %v68
    %166 = vmatprep.subr.mxu0 0.0
    %167 = vmatpush1.msra.mxu0 %v67
    %168 = vmatprep.subr.mxu0 0.0
    %169 = vmatpush1.msra.mxu0 %v66
    %170 = vmatprep.subr.mxu0 0.0
    %171 = vmatpush1.msra.mxu0 %v65
    %172 = vmatprep.subr.mxu0 0.0
    %173 = vmatpush1.msra.mxu0 %v64
    %174 = vmatprep.subr.mxu0 0.0
    %175 = vmatpush1.msra.mxu0 %v63
    %176 = vmatprep.subr.mxu0 0.0
    %177 = vmatpush1.msra.mxu0 %v62
    %178 = vmatprep.subr.mxu0 0.0
    %179 = vmatpush1.msra.mxu0 %v61
    %180 = vmatprep.subr.mxu0 0.0
    %181 = vmatpush1.msra.mxu0 %v60
    %182 = vmatprep.subr.mxu0 0.0
    %183 = vmatpush1.msra.mxu0 %v59
    %184 = vmatprep.subr.mxu0 0.0
    %185 = vmatpush1.msra.mxu0 %v58
    %186 = vmatprep.subr.mxu0 0.0
    %187 = vmatpush1.msra.mxu0 %v57
    %188 = vmatprep.subr.mxu0 0.0
    %189 = vmatpush2.msra.mxu0 0.0
    %190 = vmatprep.subr.mxu0 0.0
    %191 = vmatpush2.msra.mxu0 0.0
    %192 = vmatprep.subr.mxu0 0.0
    %193 = vmatpush2.msra.mxu0 0.0
    %194 = vmatprep.subr.mxu0 0.0
    %195 = vmatpush2.msra.mxu0 0.0
    %196 = vmatprep.subr.mxu0 0.0
    %197 = vmatpush2.msra.mxu0 0.0
    %198 = vmatprep.subr.mxu0 0.0
    %199 = vmatpush2.msra.mxu0 0.0
    %200 = vmatprep.subr.mxu0 0.0
    %201 = vmatpush2.msra.mxu0 0.0
    %202 = vmatprep.subr.mxu0 0.0
    %203 = vmatpush2.msra.mxu0 0.0
    %204 = vmatprep.subr.mxu0 0.0
    %205 = vmatpush2.msra.mxu0 0.0
    %206 = vmatprep.subr.mxu0 0.0
    %207 = vmatpush2.msra.mxu0 0.0
    %208 = vmatprep.subr.mxu0 0.0
    %209 = vmatpush2.msra.mxu0 0.0
    %210 = vmatprep.subr.mxu0 0.0
    %211 = vmatpush2.msra.mxu0 0.0
    %212 = vmatprep.subr.mxu0 0.0
    %213 = vmatpush2.msra.mxu0 0.0
    %214 = vmatprep.subr.mxu0 0.0
    %215 = vmatpush2.msra.mxu0 0.0
    %216 = vmatprep.subr.mxu0 0.0
    %217 = vmatpush2.msra.mxu0 0.0
    %218 = vmatprep.subr.mxu0 0.0
    %219 = vmatpush2.msra.mxu0 0.0
    %220 = vmatprep.mubr.f32.mxu0 0.0
    %221 = vmatmul.mubr.f32.gmra.mxu0 %v155
    %v222 = vpop.f32.mrf.mxu0
    %v223 = vadd.f32 0.0, %v222
    %v224 = vpop.f32.mrf.mxu0
    %225 = vdwg.mxu0
    %v226 = vadd.f32 %v154, %v223
    %s227 = scalar_lea.vmem [#allocation4], 8
    %v228 = vld [vmem:[%s227] sm:$0xff]
    %v229 = vadd.f32 %v226, %v228
    %v230 = vtanh.pop %v229
    %231 = vst [vmem:[#allocation2] sm:$0xff] %v229
    %232 = vst [vmem:[#allocation3] sm:$0xff] %v230
    %s233 = scalar_lea.vmem [#allocation9], 8
    %234 = vst [vmem:[%s233] sm:$0xff] %v230
    %v235 = vld [vmem:[#allocation2] sm:$0xff]
    %v236 = vmul.f32 %v235, 0.8
    %v237 = vld [vmem:[#allocation3] sm:$0xff]
    %238 = vmatprep.subr.mxu0 0.0
    %239 = vmatpush1.msra.mxu0 %v72
    %240 = vmatprep.subr.mxu0 0.0
    %241 = vmatpush1.msra.mxu0 %v71
    %242 = vmatprep.subr.mxu0 0.0
    %243 = vmatpush1.msra.mxu0 %v70
    %244 = vmatprep.subr.mxu0 0.0
    %245 = vmatpush1.msra.mxu0 %v69
    %246 = vmatprep.subr.mxu0 0.0
    %247 = vmatpush1.msra.mxu0 %v68
    %248 = vmatprep.subr.mxu0 0.0
    %249 = vmatpush1.msra.mxu0 %v67
    %250 = vmatprep.subr.mxu0 0.0
    %251 = vmatpush1.msra.mxu0 %v66
    %252 = vmatprep.subr.mxu0 0.0
    %253 = vmatpush1.msra.mxu0 %v65
    %254 = vmatprep.subr.mxu0 0.0
    %255 = vmatpush1.msra.mxu0 %v64
    %256 = vmatprep.subr.mxu0 0.0
    %257 = vmatpush1.msra.mxu0 %v63
    %258 = vmatprep.subr.mxu0 0.0
    %259 = vmatpush1.msra.mxu0 %v62
    %260 = vmatprep.subr.mxu0 0.0
    %261 = vmatpush1.msra.mxu0 %v61
    %262 = vmatprep.subr.mxu0 0.0
    %263 = vmatpush1.msra.mxu0 %v60
    %264 = vmatprep.subr.mxu0 0.0
    %265 = vmatpush1.msra.mxu0 %v59
    %266 = vmatprep.subr.mxu0 0.0
    %267 = vmatpush1.msra.mxu0 %v58
    %268 = vmatprep.subr.mxu0 0.0
    %269 = vmatpush1.msra.mxu0 %v57
    %270 = vmatprep.subr.mxu0 0.0
    %271 = vmatpush2.msra.mxu0 0.0
    %272 = vmatprep.subr.mxu0 0.0
    %273 = vmatpush2.msra.mxu0 0.0
    %274 = vmatprep.subr.mxu0 0.0
    %275 = vmatpush2.msra.mxu0 0.0
    %276 = vmatprep.subr.mxu0 0.0
    %277 = vmatpush2.msra.mxu0 0.0
    %278 = vmatprep.subr.mxu0 0.0
    %279 = vmatpush2.msra.mxu0 0.0
    %280 = vmatprep.subr.mxu0 0.0
    %281 = vmatpush2.msra.mxu0 0.0
    %282 = vmatprep.subr.mxu0 0.0
    %283 = vmatpush2.msra.mxu0 0.0
    %284 = vmatprep.subr.mxu0 0.0
    %285 = vmatpush2.msra.mxu0 0.0
    %286 = vmatprep.subr.mxu0 0.0
    %287 = vmatpush2.msra.mxu0 0.0
    %288 = vmatprep.subr.mxu0 0.0
    %289 = vmatpush2.msra.mxu0 0.0
    %290 = vmatprep.subr.mxu0 0.0
    %291 = vmatpush2.msra.mxu0 0.0
    %292 = vmatprep.subr.mxu0 0.0
    %293 = vmatpush2.msra.mxu0 0.0
    %294 = vmatprep.subr.mxu0 0.0
    %295 = vmatpush2.msra.mxu0 0.0
    %296 = vmatprep.subr.mxu0 0.0
    %297 = vmatpush2.msra.mxu0 0.0
    %298 = vmatprep.subr.mxu0 0.0
    %299 = vmatpush2.msra.mxu0 0.0
    %300 = vmatprep.subr.mxu0 0.0
    %301 = vmatpush2.msra.mxu0 0.0
    %302 = vmatprep.mubr.f32.mxu0 0.0
    %303 = vmatmul.mubr.f32.gmra.mxu0 %v237
    %v304 = vpop.f32.mrf.mxu0
    %v305 = vadd.f32 0.0, %v304
    %v306 = vpop.f32.mrf.mxu0
    %307 = vdwg.mxu0
    %v308 = vadd.f32 %v236, %v305
    %s309 = scalar_lea.vmem [#allocation4], 16
    %v310 = vld [vmem:[%s309] sm:$0xff]
    %v311 = vadd.f32 %v308, %v310
    %v312 = vtanh.pop %v311
    %313 = vst [vmem:[#allocation2] sm:$0xff] %v311
    %314 = vst [vmem:[#allocation3] sm:$0xff] %v312
    %s315 = scalar_lea.vmem [#allocation9], 16
    %316 = vst [vmem:[%s315] sm:$0xff] %v312
    %v317 = vld [vmem:[#allocation2] sm:$0xff]
    %v318 = vmul.f32 %v317, 0.8
    %v319 = vld [vmem:[#allocation3] sm:$0xff]
    %320 = vmatprep.subr.mxu0 0.0
    %321 = vmatpush1.msra.mxu0 %v72
    %322 = vmatprep.subr.mxu0 0.0
    %323 = vmatpush1.msra.mxu0 %v71
    %324 = vmatprep.subr.mxu0 0.0
    %325 = vmatpush1.msra.mxu0 %v70
    %326 = vmatprep.subr.mxu0 0.0
    %327 = vmatpush1.msra.mxu0 %v69
    %328 = vmatprep.subr.mxu0 0.0
    %329 = vmatpush1.msra.mxu0 %v68
    %330 = vmatprep.subr.mxu0 0.0
    %331 = vmatpush1.msra.mxu0 %v67
    %332 = vmatprep.subr.mxu0 0.0
    %333 = vmatpush1.msra.mxu0 %v66
    %334 = vmatprep.subr.mxu0 0.0
    %335 = vmatpush1.msra.mxu0 %v65
    %336 = vmatprep.subr.mxu0 0.0
    %337 = vmatpush1.msra.mxu0 %v64
    %338 = vmatprep.subr.mxu0 0.0
    %339 = vmatpush1.msra.mxu0 %v63
    %340 = vmatprep.subr.mxu0 0.0
    %341 = vmatpush1.msra.mxu0 %v62
    %342 = vmatprep.subr.mxu0 0.0
    %343 = vmatpush1.msra.mxu0 %v61
    %344 = vmatprep.subr.mxu0 0.0
    %345 = vmatpush1.msra.mxu0 %v60
    %346 = vmatprep.subr.mxu0 0.0
    %347 = vmatpush1.msra.mxu0 %v59
    %348 = vmatprep.subr.mxu0 0.0
    %349 = vmatpush1.msra.mxu0 %v58
    %350 = vmatprep.subr.mxu0 0.0
    %351 = vmatpush1.msra.mxu0 %v57
    %352 = vmatprep.subr.mxu0 0.0
    %353 = vmatpush2.msra.mxu0 0.0
    %354 = vmatprep.subr.mxu0 0.0
    %355 = vmatpush2.msra.mxu0 0.0
    %356 = vmatprep.subr.mxu0 0.0
    %357 = vmatpush2.msra.mxu0 0.0
    %358 = vmatprep.subr.mxu0 0.0
    %359 = vmatpush2.msra.mxu0 0.0
    %360 = vmatprep.subr.mxu0 0.0
    %361 = vmatpush2.msra.mxu0 0.0
    %362 = vmatprep.subr.mxu0 0.0
    %363 = vmatpush2.msra.mxu0 0.0
    %364 = vmatprep.subr.mxu0 0.0
    %365 = vmatpush2.msra.mxu0 0.0
    %366 = vmatprep.subr.mxu0 0.0
    %367 = vmatpush2.msra.mxu0 0.0
    %368 = vmatprep.subr.mxu0 0.0
    %369 = vmatpush2.msra.mxu0 0.0
    %370 = vmatprep.subr.mxu0 0.0
    %371 = vmatpush2.msra.mxu0 0.0
    %372 = vmatprep.subr.mxu0 0.0
    %373 = vmatpush2.msra.mxu0 0.0
    %374 = vmatprep.subr.mxu0 0.0
    %375 = vmatpush2.msra.mxu0 0.0
    %376 = vmatprep.subr.mxu0 0.0
    %377 = vmatpush2.msra.mxu0 0.0
    %378 = vmatprep.subr.mxu0 0.0
    %379 = vmatpush2.msra.mxu0 0.0
    %380 = vmatprep.subr.mxu0 0.0
    %381 = vmatpush2.msra.mxu0 0.0
    %382 = vmatprep.subr.mxu0 0.0
    %383 = vmatpush2.msra.mxu0 0.0
    %384 = vmatprep.mubr.f32.mxu0 0.0
    %385 = vmatmul.mubr.f32.gmra.mxu0 %v319
    %v386 = vpop.f32.mrf.mxu0
    %v387 = vadd.f32 0.0, %v386
    %v388 = vpop.f32.mrf.mxu0
    %389 = vdwg.mxu0
    %v390 = vadd.f32 %v318, %v387
    %s391 = scalar_lea.vmem [#allocation4], 24
    %v392 = vld [vmem:[%s391] sm:$0xff]
    %v393 = vadd.f32 %v390, %v392
    %v394 = vtanh.pop %v393
    %395 = vst [vmem:[#allocation2] sm:$0xff] %v393
    %396 = vst [vmem:[#allocation3] sm:$0xff] %v394
    %s397 = scalar_lea.vmem [#allocation9], 24
    %398 = vst [vmem:[%s397] sm:$0xff] %v394
    %v399 = vld [vmem:[#allocation2] sm:$0xff]
    %v400 = vmul.f32 %v399, 0.8
    %v401 = vld [vmem:[#allocation3] sm:$0xff]
    %402 = vmatprep.subr.mxu0 0.0
    %403 = vmatpush1.msra.mxu0 %v72
    %404 = vmatprep.subr.mxu0 0.0
    %405 = vmatpush1.msra.mxu0 %v71
    %406 = vmatprep.subr.mxu0 0.0
    %407 = vmatpush1.msra.mxu0 %v70
    %408 = vmatprep.subr.mxu0 0.0
    %409 = vmatpush1.msra.mxu0 %v69
    %410 = vmatprep.subr.mxu0 0.0
    %411 = vmatpush1.msra.mxu0 %v68
    %412 = vmatprep.subr.mxu0 0.0
    %413 = vmatpush1.msra.mxu0 %v67
    %414 = vmatprep.subr.mxu0 0.0
    %415 = vmatpush1.msra.mxu0 %v66
    %416 = vmatprep.subr.mxu0 0.0
    %417 = vmatpush1.msra.mxu0 %v65
    %418 = vmatprep.subr.mxu0 0.0
    %419 = vmatpush1.msra.mxu0 %v64
    %420 = vmatprep.subr.mxu0 0.0
    %421 = vmatpush1.msra.mxu0 %v63
    %422 = vmatprep.subr.mxu0 0.0
    %423 = vmatpush1.msra.mxu0 %v62
    %424 = vmatprep.subr.mxu0 0.0
    %425 = vmatpush1.msra.mxu0 %v61
    %426 = vmatprep.subr.mxu0 0.0
    %427 = vmatpush1.msra.mxu0 %v60
    %428 = vmatprep.subr.mxu0 0.0
    %429 = vmatpush1.msra.mxu0 %v59
    %430 = vmatprep.subr.mxu0 0.0
    %431 = vmatpush1.msra.mxu0 %v58
    %432 = vmatprep.subr.mxu0 0.0
    %433 = vmatpush1.msra.mxu0 %v57
    %434 = vmatprep.subr.mxu0 0.0
    %435 = vmatpush2.msra.mxu0 0.0
    %436 = vmatprep.subr.mxu0 0.0
    %437 = vmatpush2.msra.mxu0 0.0
    %438 = vmatprep.subr.mxu0 0.0
    %439 = vmatpush2.msra.mxu0 0.0
    %440 = vmatprep.subr.mxu0 0.0
    %441 = vmatpush2.msra.mxu0 0.0
    %442 = vmatprep.subr.mxu0 0.0
    %443 = vmatpush2.msra.mxu0 0.0
    %444 = vmatprep.subr.mxu0 0.0
    %445 = vmatpush2.msra.mxu0 0.0
    %446 = vmatprep.subr.mxu0 0.0
    %447 = vmatpush2.msra.mxu0 0.0
    %448 = vmatprep.subr.mxu0 0.0
    %449 = vmatpush2.msra.mxu0 0.0
    %450 = vmatprep.subr.mxu0 0.0
    %451 = vmatpush2.msra.mxu0 0.0
    %452 = vmatprep.subr.mxu0 0.0
    %453 = vmatpush2.msra.mxu0 0.0
    %454 = vmatprep.subr.mxu0 0.0
    %455 = vmatpush2.msra.mxu0 0.0
    %456 = vmatprep.subr.mxu0 0.0
    %457 = vmatpush2.msra.mxu0 0.0
    %458 = vmatprep.subr.mxu0 0.0
    %459 = vmatpush2.msra.mxu0 0.0
    %460 = vmatprep.subr.mxu0 0.0
    %461 = vmatpush2.msra.mxu0 0.0
    %462 = vmatprep.subr.mxu0 0.0
    %463 = vmatpush2.msra.mxu0 0.0
    %464 = vmatprep.subr.mxu0 0.0
    %465 = vmatpush2.msra.mxu0 0.0
    %466 = vmatprep.mubr.f32.mxu0 0.0
    %467 = vmatmul.mubr.f32.gmra.mxu0 %v401
    %v468 = vpop.f32.mrf.mxu0
    %v469 = vadd.f32 0.0, %v468
    %v470 = vpop.f32.mrf.mxu0
    %471 = vdwg.mxu0
    %v472 = vadd.f32 %v400, %v469
    %s473 = scalar_lea.vmem [#allocation4], 32
    %v474 = vld [vmem:[%s473] sm:$0xff]
    %v475 = vadd.f32 %v472, %v474
    %v476 = vtanh.pop %v475
    %477 = vst [vmem:[#allocation2] sm:$0xff] %v475
    %478 = vst [vmem:[#allocation3] sm:$0xff] %v476
    %s479 = scalar_lea.vmem [#allocation9], 32
    %480 = vst [vmem:[%s479] sm:$0xff] %v476
    %v481 = vld [vmem:[#allocation2] sm:$0xff]
    %v482 = vmul.f32 %v481, 0.8
    %v483 = vld [vmem:[#allocation3] sm:$0xff]
    %484 = vmatprep.subr.mxu0 0.0
    %485 = vmatpush1.msra.mxu0 %v72
    %486 = vmatprep.subr.mxu0 0.0
    %487 = vmatpush1.msra.mxu0 %v71
    %488 = vmatprep.subr.mxu0 0.0
    %489 = vmatpush1.msra.mxu0 %v70
    %490 = vmatprep.subr.mxu0 0.0
    %491 = vmatpush1.msra.mxu0 %v69
    %492 = vmatprep.subr.mxu0 0.0
    %493 = vmatpush1.msra.mxu0 %v68
    %494 = vmatprep.subr.mxu0 0.0
    %495 = vmatpush1.msra.mxu0 %v67
    %496 = vmatprep.subr.mxu0 0.0
    %497 = vmatpush1.msra.mxu0 %v66
    %498 = vmatprep.subr.mxu0 0.0
    %499 = vmatpush1.msra.mxu0 %v65
    %500 = vmatprep.subr.mxu0 0.0
    %501 = vmatpush1.msra.mxu0 %v64
    %502 = vmatprep.subr.mxu0 0.0
    %503 = vmatpush1.msra.mxu0 %v63
    %504 = vmatprep.subr.mxu0 0.0
    %505 = vmatpush1.msra.mxu0 %v62
    %506 = vmatprep.subr.mxu0 0.0
    %507 = vmatpush1.msra.mxu0 %v61
    %508 = vmatprep.subr.mxu0 0.0
    %509 = vmatpush1.msra.mxu0 %v60
    %510 = vmatprep.subr.mxu0 0.0
    %511 = vmatpush1.msra.mxu0 %v59
    %512 = vmatprep.subr.mxu0 0.0
    %513 = vmatpush1.msra.mxu0 %v58
    %514 = vmatprep.subr.mxu0 0.0
    %515 = vmatpush1.msra.mxu0 %v57
    %516 = vmatprep.subr.mxu0 0.0
    %517 = vmatpush2.msra.mxu0 0.0
    %518 = vmatprep.subr.mxu0 0.0
    %519 = vmatpush2.msra.mxu0 0.0
    %520 = vmatprep.subr.mxu0 0.0
    %521 = vmatpush2.msra.mxu0 0.0
    %522 = vmatprep.subr.mxu0 0.0
    %523 = vmatpush2.msra.mxu0 0.0
    %524 = vmatprep.subr.mxu0 0.0
    %525 = vmatpush2.msra.mxu0 0.0
    %526 = vmatprep.subr.mxu0 0.0
    %527 = vmatpush2.msra.mxu0 0.0
    %528 = vmatprep.subr.mxu0 0.0
    %529 = vmatpush2.msra.mxu0 0.0
    %530 = vmatprep.subr.mxu0 0.0
    %531 = vmatpush2.msra.mxu0 0.0
    %532 = vmatprep.subr.mxu0 0.0
    %533 = vmatpush2.msra.mxu0 0.0
    %534 = vmatprep.subr.mxu0 0.0
    %535 = vmatpush2.msra.mxu0 0.0
    %536 = vmatprep.subr.mxu0 0.0
    %537 = vmatpush2.msra.mxu0 0.0
    %538 = vmatprep.subr.mxu0 0.0
    %539 = vmatpush2.msra.mxu0 0.0
    %540 = vmatprep.subr.mxu0 0.0
    %541 = vmatpush2.msra.mxu0 0.0
    %542 = vmatprep.subr.mxu0 0.0
    %543 = vmatpush2.msra.mxu0 0.0
    %544 = vmatprep.subr.mxu0 0.0
    %545 = vmatpush2.msra.mxu0 0.0
    %546 = vmatprep.subr.mxu0 0.0
    %547 = vmatpush2.msra.mxu0 0.0
    %548 = vmatprep.mubr.f32.mxu0 0.0
    %549 = vmatmul.mubr.f32.gmra.mxu0 %v483
    %v550 = vpop.f32.mrf.mxu0
    %v551 = vadd.f32 0.0, %v550
    %v552 = vpop.f32.mrf.mxu0
    %553 = vdwg.mxu0
    %v554 = vadd.f32 %v482, %v551
    %s555 = scalar_lea.vmem [#allocation4], 40
    %v556 = vld [vmem:[%s555] sm:$0xff]
    %v557 = vadd.f32 %v554, %v556
    %v558 = vtanh.pop %v557
    %559 = vst [vmem:[#allocation2] sm:$0xff] %v557
    %560 = vst [vmem:[#allocation3] sm:$0xff] %v558
    %s561 = scalar_lea.vmem [#allocation9], 40
    %562 = vst [vmem:[%s561] sm:$0xff] %v558
    %v563 = vld [vmem:[#allocation2] sm:$0xff]
    %v564 = vmul.f32 %v563, 0.8
    %v565 = vld [vmem:[#allocation3] sm:$0xff]
    %566 = vmatprep.subr.mxu0 0.0
    %567 = vmatpush1.msra.mxu0 %v72
    %568 = vmatprep.subr.mxu0 0.0
    %569 = vmatpush1.msra.mxu0 %v71
    %570 = vmatprep.subr.mxu0 0.0
    %571 = vmatpush1.msra.mxu0 %v70
    %572 = vmatprep.subr.mxu0 0.0
    %573 = vmatpush1.msra.mxu0 %v69
    %574 = vmatprep.subr.mxu0 0.0
    %575 = vmatpush1.msra.mxu0 %v68
    %576 = vmatprep.subr.mxu0 0.0
    %577 = vmatpush1.msra.mxu0 %v67
    %578 = vmatprep.subr.mxu0 0.0
    %579 = vmatpush1.msra.mxu0 %v66
    %580 = vmatprep.subr.mxu0 0.0
    %581 = vmatpush1.msra.mxu0 %v65
    %582 = vmatprep.subr.mxu0 0.0
    %583 = vmatpush1.msra.mxu0 %v64
    %584 = vmatprep.subr.mxu0 0.0
    %585 = vmatpush1.msra.mxu0 %v63
    %586 = vmatprep.subr.mxu0 0.0
    %587 = vmatpush1.msra.mxu0 %v62
    %588 = vmatprep.subr.mxu0 0.0
    %589 = vmatpush1.msra.mxu0 %v61
    %590 = vmatprep.subr.mxu0 0.0
    %591 = vmatpush1.msra.mxu0 %v60
    %592 = vmatprep.subr.mxu0 0.0
    %593 = vmatpush1.msra.mxu0 %v59
    %594 = vmatprep.subr.mxu0 0.0
    %595 = vmatpush1.msra.mxu0 %v58
    %596 = vmatprep.subr.mxu0 0.0
    %597 = vmatpush1.msra.mxu0 %v57
    %598 = vmatprep.subr.mxu0 0.0
    %599 = vmatpush2.msra.mxu0 0.0
    %600 = vmatprep.subr.mxu0 0.0
    %601 = vmatpush2.msra.mxu0 0.0
    %602 = vmatprep.subr.mxu0 0.0
    %603 = vmatpush2.msra.mxu0 0.0
    %604 = vmatprep.subr.mxu0 0.0
    %605 = vmatpush2.msra.mxu0 0.0
    %606 = vmatprep.subr.mxu0 0.0
    %607 = vmatpush2.msra.mxu0 0.0
    %608 = vmatprep.subr.mxu0 0.0
    %609 = vmatpush2.msra.mxu0 0.0
    %610 = vmatprep.subr.mxu0 0.0
    %611 = vmatpush2.msra.mxu0 0.0
    %612 = vmatprep.subr.mxu0 0.0
    %613 = vmatpush2.msra.mxu0 0.0
    %614 = vmatprep.subr.mxu0 0.0
    %615 = vmatpush2.msra.mxu0 0.0
    %616 = vmatprep.subr.mxu0 0.0
    %617 = vmatpush2.msra.mxu0 0.0
    %618 = vmatprep.subr.mxu0 0.0
    %619 = vmatpush2.msra.mxu0 0.0
    %620 = vmatprep.subr.mxu0 0.0
    %621 = vmatpush2.msra.mxu0 0.0
    %622 = vmatprep.subr.mxu0 0.0
    %623 = vmatpush2.msra.mxu0 0.0
    %624 = vmatprep.subr.mxu0 0.0
    %625 = vmatpush2.msra.mxu0 0.0
    %626 = vmatprep.subr.mxu0 0.0
    %627 = vmatpush2.msra.mxu0 0.0
    %628 = vmatprep.subr.mxu0 0.0
    %629 = vmatpush2.msra.mxu0 0.0
    %630 = vmatprep.mubr.f32.mxu0 0.0
    %631 = vmatmul.mubr.f32.gmra.mxu0 %v565
    %v632 = vpop.f32.mrf.mxu0
    %v633 = vadd.f32 0.0, %v632
    %v634 = vpop.f32.mrf.mxu0
    %635 = vdwg.mxu0
    %v636 = vadd.f32 %v564, %v633
    %s637 = scalar_lea.vmem [#allocation4], 48
    %v638 = vld [vmem:[%s637] sm:$0xff]
    %v639 = vadd.f32 %v636, %v638
    %v640 = vtanh.pop %v639
    %641 = vst [vmem:[#allocation2] sm:$0xff] %v639
    %642 = vst [vmem:[#allocation3] sm:$0xff] %v640
    %s643 = scalar_lea.vmem [#allocation9], 48
    %644 = vst [vmem:[%s643] sm:$0xff] %v640
    // Predicated region
    $region26: #{tpu_custom_call.1} parent=1 // pred_check
      _
    $region27: #{tpu_custom_call.1} parent=1 // pred_check_branch
      %646 = sbr.rel (0) target = $region29
    $region28: #{tpu_custom_call.1} parent=1 // pred_region
      %s648 = ssub.s32 896, 896
      %649 = vsyncadd [#allocation6], %s648
      %s650 = sshll.u32 [#allocation9], 4
      %s651 = int_to_ptr.vmem [resolvable:$true] %s650
      %656 = dma.vmem_to_hbm [thread:$0]  %s651, 896, %s3, [#allocation6], 128, 128, 8
    $region29: #{tpu_custom_call.1} parent=1 // pred_fallthru
      _
    // Predicated region
    $region30: #{tpu_custom_call.1} parent=1 // pred_check
      _
    $region31: #{tpu_custom_call.1} parent=1 // pred_check_branch
      %658 = sbr.rel (0) target = $region33
    $region32: #{tpu_custom_call.1} parent=1 // pred_region
      %659 = dma.done [#allocation6], 896
    $region33: #{tpu_custom_call.1} parent=1 // pred_fallthru
      _
    %660 = vsyncpa [#allocation5], 1
    %661 = vsyncpa [#allocation8], 1
    %662 = vsyncpa [#allocation6], 1

</llo_original>
